<compile_context>
chip_gen: v7x
topology: tpu7x:2x2x1
jax: 0.10.0
libtpu: 0.0.40
codegen_flags: <defaults>
</compile_context>

<pallas_src>
import functools
import math

import jax
import jax.numpy as jnp
from jax.experimental import pallas as pl
from jax.experimental.pallas import tpu as pltpu


_LANE = 128
# Per-step tile budget (input double-buffer + output double-buffer + f32 temps).
# Kept well under the default scoped VMEM of every generation (16/32/32 MiB).
_VMEM_TILE_BUDGET = 14 * 1024 * 1024
# Explicit scoped-VMEM limit: > v5e's 16 MiB default, < v7x's 64 MiB physical.
_VMEM_LIMIT_BYTES = 48 * 1024 * 1024


def _mean_dim1_kernel(x_ref, o_ref, *, inv_c):
    # x_ref: (1, C, TILE_HW) in VMEM;  o_ref: (1, 1, TILE_HW) in VMEM.
    x = x_ref[...].astype(jnp.float32)                 # f32 accumulation (v5e VPU has no bf16)
    s = jnp.sum(x, axis=1, keepdims=True) * inv_c      # single VPU multiply, not a divide
    o_ref[...] = s.astype(o_ref.dtype)


def _pick_tile_hw(c, hw, itemsize):
    """Largest multiple-of-128 tile along HW that fits the VMEM budget and divides HW."""
    if hw <= _LANE or hw % _LANE != 0:
        # Full-extent last dim always satisfies the (8, 128) tiling rules.
        return hw
    # Bytes per HW element per pipeline step:
    #   input (C rows, double-buffered) + output (double-buffered) + f32 temps (~C rows).
    per_elem = (2 * c + 2) * itemsize + c * 4
    max_tile = max(_LANE, (_VMEM_TILE_BUDGET // per_elem // _LANE) * _LANE)
    if max_tile >= hw:
        return hw
    # Largest multiple of 128 dividing hw and <= max_tile (hw is a multiple of
    # 128 here, so tile=128 always qualifies) — avoids remainder blocks.
    tile = max_tile
    while hw % tile:
        tile -= _LANE
    return tile
    # NOTE: for extremely large C (tens of thousands of channels) even TILE_HW=128
    # could exceed the budget; that regime would want an extra "arbitrary" C grid
    # axis with an f32 VMEM accumulator (P3 pattern). Not needed at these shapes.


def average_dim1(x):
    """torch.mean(x, dim=1) for an (N, C, *spatial) array via a Pallas TPU kernel."""
    n, c = x.shape[0], x.shape[1]
    spatial = x.shape[2:]
    hw = math.prod(spatial) if spatial else 1

    xf = x.reshape(n, c, hw)  # lane-dense layout: flattened spatial on the 128-lane axis
    tile = _pick_tile_hw(c, hw, xf.dtype.itemsize)
    grid = (n, pl.cdiv(hw, tile))

    out = pl.pallas_call(
        functools.partial(_mean_dim1_kernel, inv_c=1.0 / c),
        out_shape=jax.ShapeDtypeStruct((n, 1, hw), x.dtype),
        grid_spec=pltpu.PrefetchScalarGridSpec(
            num_scalar_prefetch=0,
            grid=grid,
            in_specs=[
                # (1, C, TILE_HW): C equals the full dim, TILE_HW is a multiple
                # of 128 (or the full HW), so the (8, 128) rule is satisfied.
                pl.BlockSpec((1, c, tile), lambda i, j: (i, 0, j)),
            ],
            # (1, 1, TILE_HW): singleton middle axis equals the full dim, last
            # dim is lane-dense -> unmasked vst stores.
            out_specs=pl.BlockSpec((1, 1, tile), lambda i, j: (i, 0, j)),
        ),
        compiler_params=pltpu.CompilerParams(
            # Both axes are independent (C reduction is intra-block) -> megacore
            # can shard the (N, HW-tile) grid across TensorCores on v7x.
            dimension_semantics=("parallel", "parallel"),
            vmem_limit_bytes=_VMEM_LIMIT_BYTES,
        ),
    )(xf)

    return out.reshape((n,) + spatial)


if __name__ == "__main__":
    key = jax.random.PRNGKey(0)
    x = jax.random.normal(key, (2, 4, 16, 16), dtype=jnp.float32)

    out = jax.block_until_ready(average_dim1(x))

    # Reference check against plain JAX (same semantics as torch.mean(x, dim=1)).
    ref = jnp.mean(x, axis=1)
    assert out.shape == ref.shape == (2, 16, 16)
    assert jnp.allclose(out, ref, atol=1e-6, rtol=1e-6)

    print("KERNEL_OK")
</pallas_src>

<mosaic_0001>
module attributes {stable_mosaic.version = 11 : i64} {
  func.func @_mean_dim1_kernel(%arg0: i32, %arg1: i32, %arg2: memref<1x4x256xf32, #tpu.memory_space<vmem>>, %arg3: memref<1x1x256xf32, #tpu.memory_space<vmem>>) attributes {dimension_semantics = [#tpu.dimension_semantics<parallel>, #tpu.dimension_semantics<parallel>], iteration_bounds = array<i64: 2, 1>, scalar_prefetch = 0 : i64, scratch_operands = 0 : i64, tpu.core_type = #tpu.core_type<tc>, window_params = [{transform_indices = @transform_0, window_bounds = array<i64: 1, 4, 256>}, {transform_indices = @transform_1, window_bounds = array<i64: 1, 1, 256>}]} {
    %c0 = arith.constant 0 : index
    %c0_0 = arith.constant 0 : index
    %c0_1 = arith.constant 0 : index
    %0 = vector.load %arg2[%c0, %c0_0, %c0_1] : memref<1x4x256xf32, #tpu.memory_space<vmem>>, vector<1x4x256xf32>
    %cst = arith.constant dense<0.000000e+00> : vector<1x256xf32>
    %1 = vector.multi_reduction <add>, %0, %cst [1] : vector<1x4x256xf32> to vector<1x256xf32>
    %2 = vector.shape_cast %1 : vector<1x256xf32> to vector<1x1x256xf32>
    %cst_2 = arith.constant 2.500000e-01 : f32
    %3 = vector.broadcast %cst_2 : f32 to vector<1x1x256xf32>
    %4 = arith.mulf %2, %3 : vector<1x1x256xf32>
    %c0_3 = arith.constant 0 : index
    %c0_4 = arith.constant 0 : index
    %c0_5 = arith.constant 0 : index
    %5 = vector.load %arg3[%c0_3, %c0_4, %c0_5] : memref<1x1x256xf32, #tpu.memory_space<vmem>>, vector<1x1x256xf32>
    tpu.vector_store %arg3[%c0_3, %c0_4, %c0_5], %4 {strides = array<i32>} : memref<1x1x256xf32, #tpu.memory_space<vmem>>, vector<1x1x256xf32>,
    return
  }
  func.func @transform_0(%arg0: i32, %arg1: i32) -> (i32, i32, i32) {
    %c0_i32 = arith.constant 0 : i32
    %c0_i32_0 = arith.constant 0 : i32
    return %arg0, %c0_i32, %arg1 : i32, i32, i32
  }
  func.func @transform_1(%arg0: i32, %arg1: i32) -> (i32, i32, i32) {
    %c0_i32 = arith.constant 0 : i32
    %c0_i32_0 = arith.constant 0 : i32
    return %arg0, %c0_i32, %arg1 : i32, i32, i32
  }
}

</mosaic_0001>

<llo_original>
// kernel: tpu_custom_call.1
$region0: #{tpu_custom_call.1}
  #allocation0 [shape = 'u32[]', space=smem, size = 0x4, offset = 0x4, fixed_abs, tag = 'smem constant byte address 0x4 - core index']
  #allocation1 [shape = 'u32[144,128]{1,0:T(1,128)}', space=vmem, size = 0x12000, scoped, tag = 'internal scratch']
  %s0 = inlined_call_operand.hbm [shape: f32[2,4,256], index: 0, kind: input, shape index: {}]
  %s1 = inlined_call_operand.hbm [shape: f32[2,1,256], index: 1, kind: output, shape index: {}]
  %s2 = sld [smem:[#allocation0]]
  $region41: #{tpu_custom_call.1} parent=0
    _
  %s4 = ssub.s32 1, %s2
  %s5 = scalar_select 0, %s4, %s2
  $region1: #{tpu_custom_call.1} parent=0
    #allocation2 [shape = 'u8[8192]{0}', space=vmem, size = 0x2000, scoped, tag = 'input window, operand 0']
    #allocation3 [shape = 's32[2]{0}', space=sflag, size = 0x8, scoped, tag = 'scoped memory for tpu_custom_call.1']
    #allocation4 [shape = 's32[2]{0}', space=sflag, size = 0x8, scoped, tag = 'scoped memory for tpu_custom_call.1']
    #allocation5 [shape = 'u8[2048]{0}', space=vmem, size = 0x800, scoped, tag = 'output window, operand 0']
    %6 = vsyncpa [#allocation3], 0
    %s7 = scalar_lea.sflag [#allocation3], 1
    %8 = vsyncpa %s7, 0
    %9 = vsyncpa [#allocation4], 0
    %s10 = scalar_lea.sflag [#allocation4], 1
    %11 = vsyncpa %s10, 0
    loop: start=0, step=1, limit=4
    $region2: #{tpu_custom_call.1} parent=1 // loop_pre_header
      _
    $region3: #{tpu_custom_call.1} parent=1 // loop_header
      %s13 = sphi 0, %s17
      %p14 = scmp.ge.s32.totalorder %s13, 4
      %s20 = sphi 0, %s32
      %s21 = sphi 0, %s28
      %s22 = sphi 0, %s20
      %s23 = sphi 0, %s21
      %s24 = sphi 0, %s22
      %s25 = sphi 0, %s23
      %s37 = sphi 0, %s39
      %s40 = sphi 0, %s37
      %s41 = sphi 0, %s40
      %s57 = sphi 0, %s41
      %s65 = sphi 0, %s67
      %s68 = sphi 0, %s65
      %s69 = sphi 0, %s68
      %s85 = sphi 0, %s69
    $region4: #{tpu_custom_call.1} parent=1 // loop_header_branch
      %16 = sbr.rel (%p14) target = $region8
    $region5: #{tpu_custom_call.1} parent=1 // loop_body
      %s18 = ssub.s32 %s13, 1
      %s19 = ssub.s32 %s13, 2
      %s26 = sadd.s32 1, %s21
      %p27 = scmp.ge.s32.totalorder %s26, 1
      %s28 = scalar_select %p27, 0, %s26
      %s29 = sadd.s32 1, %s20
      %s30 = scalar_select %p27, %s29, %s20
      %p31 = scmp.ge.s32.totalorder %s30, 2
      %s32 = scalar_select %p31, 0, %s30
      %s33 = ssub.s32 %s20, %s32
      %s34 = ssub.s32 %s21, %s28
      %s35 = sor.u32 %s33, %s34
      %p36 = scmp.eq.s32.totalorder %s35, 0
      %s38 = sadd.s32 %s37, 1
      %s39 = scalar_select %p36, %s37, %s38
      %p42 = pneg %p36
      %p43 = scmp.eq.s32.totalorder %s13, 1
      %p44 = por %p42, %p43
      %p45 = scmp.ne.s32.totalorder %s37, %s40
      %p46 = scmp.eq.s32.totalorder %s13, 0
      %p47 = por %p45, %p46
      %p48 = scmp.ne.s32.totalorder %s37, %s40
      %p49 = scmp.eq.s32.totalorder %s18, 1
      %p50 = por %p48, %p49
      %p51 = scmp.ne.s32.totalorder %s40, %s41
      %p52 = scmp.eq.s32.totalorder %s18, 0
      %p53 = por %p51, %p52
      %p54 = scmp.ne.s32.totalorder %s40, %s41
      %p55 = scmp.eq.s32.totalorder %s19, 1
      %p56 = por %p54, %p55
      %p58 = scmp.ne.s32.totalorder %s41, %s57
      %p59 = scmp.eq.s32.totalorder %s19, 0
      %p60 = por %p58, %p59
      %s61 = ssub.s32 %s20, %s32
      %s62 = ssub.s32 %s21, %s28
      %s63 = sor.u32 %s61, %s62
      %p64 = scmp.eq.s32.totalorder %s63, 0
      %s66 = sadd.s32 %s65, 1
      %s67 = scalar_select %p64, %s65, %s66
      %p70 = pneg %p64
      %p71 = scmp.eq.s32.totalorder %s13, 1
      %p72 = por %p70, %p71
      %p73 = scmp.ne.s32.totalorder %s65, %s68
      %p74 = scmp.eq.s32.totalorder %s13, 0
      %p75 = por %p73, %p74
      %p76 = scmp.ne.s32.totalorder %s65, %s68
      %p77 = scmp.eq.s32.totalorder %s18, 1
      %p78 = por %p76, %p77
      %p79 = scmp.ne.s32.totalorder %s68, %s69
      %p80 = scmp.eq.s32.totalorder %s18, 0
      %p81 = por %p79, %p80
      %p82 = scmp.ne.s32.totalorder %s68, %s69
      %p83 = scmp.eq.s32.totalorder %s19, 1
      %p84 = por %p82, %p83
      %p86 = scmp.ne.s32.totalorder %s69, %s85
      %p87 = scmp.eq.s32.totalorder %s19, 0
      %p88 = por %p86, %p87
      %p89 = scmp.le.s32.totalorder 1, %s13
      %p90 = scmp.lt.s32.totalorder %s13, 3
      %p91 = pnand %p89, %p90
      %p92 = pneg %p91
      // Predicated region
      $region9: #{tpu_custom_call.1} parent=5 // pred_check
        _
      $region10: #{tpu_custom_call.1} parent=5 // pred_check_branch
        %94 = sbr.rel (%p91) target = $region12
      $region11: #{tpu_custom_call.1} parent=5 // pred_region
        %s95 = ssub.s32 %s13, 1
      $region12: #{tpu_custom_call.1} parent=5 // pred_fallthru
        _
      %p96 = scmp.lt.s32.totalorder %s13, 2
      // Predicated region
      $region13: #{tpu_custom_call.1} parent=5 // pred_check
        %p97 = pneg %p96
      $region14: #{tpu_custom_call.1} parent=5 // pred_check_branch
        %99 = sbr.rel (%p97) target = $region16
      $region15: #{tpu_custom_call.1} parent=5 // pred_region
        // Predicated region
        $region17: #{tpu_custom_call.1} parent=15 // pred_check
          %p100 = pneg %p47
        $region18: #{tpu_custom_call.1} parent=15 // pred_check_branch
          %102 = sbr.rel (%p100) target = $region20
        $region19: #{tpu_custom_call.1} parent=15 // pred_region
          %s103 = sand.u32 %s37, 1
          %s104 = scalar_lea.sflag [#allocation3], %s103
          %s105 = sand.u32 %s37, 1
          %s106 = smul.addr %s105, 8
          %s107 = scalar_lea.vmem [#allocation2], %s106
          %s108 = smul.u32 2, %s21
          %s110 = ssub.s32 128, 128
          %111 = vsyncadd %s104, %s110
          %s112 = smul.addr %s20, 2
          %s113 = sadd.s32 %s108, %s112
          %s114 = smul.addr %s113, 64
          %s115 = scalar_lea.hbm %s0, %s114
          %s117 = sshll.u32 %s107, 4
          %s118 = int_to_ptr.vmem [resolvable:$true] %s117
          %120 = dma.hbm_to_vmem [thread:$0]  %s115, 128, %s118, %s104
        $region20: #{tpu_custom_call.1} parent=15 // pred_fallthru
          _
      $region16: #{tpu_custom_call.1} parent=5 // pred_fallthru
        _
      %p121 = scmp.le.s32.totalorder 1, %s13
      %p122 = scmp.lt.s32.totalorder %s13, 3
      %p123 = pnand %p121, %p122
      %p124 = pneg %p123
      // Predicated region
      $region21: #{tpu_custom_call.1} parent=5 // pred_check
        _
      $region22: #{tpu_custom_call.1} parent=5 // pred_check_branch
        %126 = sbr.rel (%p123) target = $region24
      $region23: #{tpu_custom_call.1} parent=5 // pred_region
        %s127 = ssub.s32 %s13, 1
        %s128 = sand.u32 %s40, 1
        %s129 = scalar_lea.sflag [#allocation3], %s128
        %s130 = sand.u32 %s40, 1
        %s131 = smul.addr %s130, 8
        %s132 = scalar_lea.vmem [#allocation2], %s131
        // Predicated region
        $region25: #{tpu_custom_call.1} parent=23 // pred_check
          %p133 = pneg %p53
        $region26: #{tpu_custom_call.1} parent=23 // pred_check_branch
          %135 = sbr.rel (%p133) target = $region28
        $region27: #{tpu_custom_call.1} parent=23 // pred_region
          %136 = dma.done %s129, 128
        $region28: #{tpu_custom_call.1} parent=23 // pred_fallthru
          _
        %s137 = sand.u32 %s40, 1
        %s138 = scalar_lea.sflag [#allocation3], %s137
        %s139 = sand.u32 %s40, 1
        %s140 = smul.addr %s139, 8
        %s141 = scalar_lea.vmem [#allocation2], %s140
        %p142 = pneg %p53
        %p143 = pneg %p50
        %p144 = pneg %p81
        %p145 = pneg %p78
        %s146 = sand.u32 %s68, 1
        %s147 = scalar_lea.sflag [#allocation4], %s146
        %s148 = sand.u32 %s68, 1
        %s149 = smul.addr %s148, 2
        %s150 = scalar_lea.vmem [#allocation5], %s149
        %s151 = smul.u32 2, %s23
        %s152 = smul.u32 2, %s23
        %v153 = vld [vmem:[%s132] sm:$0xff]
        %v155 = vcombine.high %v153, %v153
        %vm157 = vcmask 1043456
        %v158 = vsel %vm157, %v153, 0.0
        %v159 = vrot.slane %v158, 4
        %v160 = vadd.f32 %v158, %v159
        %v161 = vrot.slane %v160, 2
        %v162 = vadd.f32 %v160, %v161
        %v163 = vrot.slane %v162, 1
        %v164 = vadd.f32 %v162, %v163
        %v165 = vsel %vm157, %v155, 0.0
        %v166 = vrot.slane %v165, 4
        %v167 = vadd.f32 %v165, %v166
        %v168 = vrot.slane %v167, 2
        %v169 = vadd.f32 %v167, %v168
        %v170 = vrot.slane %v169, 1
        %v171 = vadd.f32 %v169, %v170
        %v172 = vmul.f32 %v164, 0.25
        %v173 = vmul.f32 %v171, 0.25
        %v176 = vcombine.low %v172, %v173
        %v178 = vunpack.c.l.s4 1966171168
        %v179 = vunpack.c.0.s8 %v178
        %v180 = vlaneseq
        %v181 = vshrl.u32 %v180, 7
        %v182 = vsub.s32 %v179, %v181
        %v183 = vrot.slane %v176, %v182
        %v185 = vunpack.c.l.s4 1966171168
        %v186 = vunpack.c.0.s8 %v185
        %v187 = vlaneseq
        %v188 = vshrl.u32 %v187, 7
        %v189 = vsub.s32 %v186, %v188
        %v190 = vrot.slane %v183, %v189
        %v192 = vlaneseq
        %vm193 = vcmp.ge.s32.totalorder %v192, 0
        %vm194 = vcmp.lt.s32.totalorder %v192, 256
        %vm195 = vmand %vm193, %vm194
        %196 = vst.msk [vmem:[%s150] sm:$0x3] %vm195, %v190
        %s197 = sand.u32 %s68, 1
        %s198 = scalar_lea.sflag [#allocation4], %s197
        %s199 = sand.u32 %s68, 1
        %s200 = smul.addr %s199, 2
        %s201 = scalar_lea.vmem [#allocation5], %s200
        // Predicated region
        $region29: #{tpu_custom_call.1} parent=23 // pred_check
          %p202 = pneg %p78
        $region30: #{tpu_custom_call.1} parent=23 // pred_check_branch
          %204 = sbr.rel (%p202) target = $region32
        $region31: #{tpu_custom_call.1} parent=23 // pred_region
          %s205 = smul.u32 2, %s23
          %s207 = ssub.s32 32, 32
          %208 = vsyncadd %s198, %s207
          %s209 = smul.addr %s22, 2
          %s210 = sadd.s32 %s205, %s209
          %s211 = smul.addr %s210, 16
          %s212 = scalar_lea.hbm %s1, %s211
          %s214 = sshll.u32 %s201, 4
          %s215 = int_to_ptr.vmem [resolvable:$true] %s214
          %217 = dma.vmem_to_hbm [thread:$0]  %s215, 32, %s212, %s198
        $region32: #{tpu_custom_call.1} parent=23 // pred_fallthru
          _
      $region24: #{tpu_custom_call.1} parent=5 // pred_fallthru
        _
      %p218 = scmp.le.s32.totalorder 2, %s13
      // Predicated region
      $region33: #{tpu_custom_call.1} parent=5 // pred_check
        %p219 = pneg %p218
      $region34: #{tpu_custom_call.1} parent=5 // pred_check_branch
        %221 = sbr.rel (%p219) target = $region36
      $region35: #{tpu_custom_call.1} parent=5 // pred_region
        %s222 = ssub.s32 %s13, 2
        // Predicated region
        $region37: #{tpu_custom_call.1} parent=35 // pred_check
          %p223 = pneg %p84
        $region38: #{tpu_custom_call.1} parent=35 // pred_check_branch
          %225 = sbr.rel (%p223) target = $region40
        $region39: #{tpu_custom_call.1} parent=35 // pred_region
          %s226 = sand.u32 %s69, 1
          %s227 = scalar_lea.sflag [#allocation4], %s226
          %s228 = sand.u32 %s69, 1
          %s229 = smul.addr %s228, 2
          %s230 = scalar_lea.vmem [#allocation5], %s229
          %231 = dma.done %s227, 32
        $region40: #{tpu_custom_call.1} parent=35 // pred_fallthru
          _
      $region36: #{tpu_custom_call.1} parent=5 // pred_fallthru
        _
    $region6: #{tpu_custom_call.1} parent=1 // loop_footer
      %s17 = sadd.s32 1, %s13
    $region7: #{tpu_custom_call.1} parent=1 // loop_footer_branch
      %12 = sbr.rel target = $region3
    $region8: #{tpu_custom_call.1} parent=1 // loop_exit
      _
    %232 = vsyncpa [#allocation3], 1
    %s233 = scalar_lea.sflag [#allocation3], 1
    %234 = vsyncpa %s233, 1
    %235 = vsyncpa [#allocation4], 1
    %s236 = scalar_lea.sflag [#allocation4], 1
    %237 = vsyncpa %s236, 1

</llo_original>
